<compile_context>
chip_gen: v7x
topology: tpu7x:2x2x1
jax: 0.10.0
libtpu: 0.0.40
codegen_flags: <defaults>
</compile_context>

<pallas_src>
import jax
import jax.numpy as jnp
from jax.experimental import pallas as pl
from jax.experimental.pallas import tpu as pltpu


def _mlp_kernel(x_ref, w0_ref, w1_ref, o_ref):
    # x:  [F_in,  TB]   (batch on the lane axis)
    # w0: [F_hid, F_in] (fc0.weight, resident)
    # w1: [F_out, F_hid](fc1.weight, resident)
    # o:  [F_out, TB]
    x = x_ref[...]
    h = jnp.dot(w0_ref[...], x, preferred_element_type=jnp.float32)   # [F_hid, TB]
    h = jnp.maximum(h, 0.0)                                           # ReLU (VPU)
    out = jnp.dot(w1_ref[...], h, preferred_element_type=jnp.float32) # [F_out, TB]
    o_ref[...] = out.astype(o_ref.dtype)


def last_module_forward(x, w0, w1, *, tb=512):
    """x: [B, 5] f32, w0: [10, 5] (fc0.weight), w1: [5, 10] (fc1.weight) -> [B, 5]."""
    assert tb % 128 == 0, "batch tile must be a multiple of 128 lanes"
    B, fin = x.shape
    fhid, fin0 = w0.shape
    fout, fhid1 = w1.shape
    assert fin == fin0 and fhid == fhid1

    # Feature-major: put batch on the lane axis; pad batch to a multiple of TB.
    x_fm = x.T                                            # [F_in, B]
    b_pad = ((B + tb - 1) // tb) * tb
    if b_pad != B:
        x_fm = jnp.pad(x_fm, ((0, 0), (0, b_pad - B)))    # zero rows -> zero outputs

    grid = (b_pad // tb,)
    out_fm = pl.pallas_call(
        _mlp_kernel,
        out_shape=jax.ShapeDtypeStruct((fout, b_pad), x.dtype),
        grid_spec=pltpu.PrefetchScalarGridSpec(
            num_scalar_prefetch=0,
            grid=grid,
            in_specs=[
                pl.BlockSpec((fin, tb), lambda i: (0, i)),     # x tile: lane-dense
                pl.BlockSpec((fhid, fin), lambda i: (0, 0)),   # w0 resident
                pl.BlockSpec((fout, fhid), lambda i: (0, 0)),  # w1 resident
            ],
            out_specs=pl.BlockSpec((fout, tb), lambda i: (0, i)),
        ),
        compiler_params=pltpu.CompilerParams(
            dimension_semantics=("parallel",),   # shard batch tiles across TCs (v7x)
        ),
    )(x_fm, w0, w1)

    return out_fm[:, :B].T                                # back to [B, F_out]


def last_module_forward_auto(x, w0, w1, *, tb=512, min_pallas_batch=1024):
    """Dispatch tiny batches to plain XLA; pallas_call overhead dominates there."""
    if x.shape[0] < min_pallas_batch:
        return reference_forward(x, w0, w1)
    return last_module_forward(x, w0, w1, tb=tb)


def _init_linear_weight(key, out_features, in_features):
    # Deterministic init mimicking nn.Linear's kaiming-uniform: U(-1/sqrt(in), 1/sqrt(in)).
    bound = 1.0 / jnp.sqrt(jnp.float32(in_features))
    return jax.random.uniform(
        key, (out_features, in_features), dtype=jnp.float32,
        minval=-bound, maxval=bound,
    )


def reference_forward(x, w0, w1):
    # Pure-JAX reference matching PyTorch semantics: x @ W.T per nn.Linear.
    h = jnp.maximum(x @ w0.T, 0.0)
    return h @ w1.T


if __name__ == "__main__":
    key = jax.random.PRNGKey(0)
    k_x, k_w0, k_w1 = jax.random.split(key, 3)

    B, F_IN, F_HID, F_OUT = 1024, 5, 10, 5

    x = jax.random.normal(k_x, (B, F_IN), dtype=jnp.float32)
    w0 = _init_linear_weight(k_w0, F_HID, F_IN)    # fc0.weight: [10, 5]
    w1 = _init_linear_weight(k_w1, F_OUT, F_HID)   # fc1.weight: [5, 10]

    # Pipelined path: grid of 4 batch tiles of 256 lanes each.
    out = jax.block_until_ready(last_module_forward(x, w0, w1, tb=256))
    ref = reference_forward(x, w0, w1)
    assert out.shape == (B, F_OUT)
    assert jnp.allclose(out, ref, atol=1e-5, rtol=1e-5)

    # Ragged / small batch through the same kernel (exercises the padding path).
    x_small = jax.random.normal(k_x, (8, F_IN), dtype=jnp.float32)
    out_small = jax.block_until_ready(last_module_forward(x_small, w0, w1, tb=128))
    assert jnp.allclose(out_small, reference_forward(x_small, w0, w1),
                        atol=1e-5, rtol=1e-5)

    # TODO(synk): optionally carry x/out in bfloat16 (2x HBM-bandwidth win) once
    # downstream numerics tolerate it; compute stays f32 via preferred_element_type.
    print("KERNEL_OK")
</pallas_src>

<mosaic_0001>
module attributes {stable_mosaic.version = 11 : i64} {
  func.func @_mlp_kernel(%arg0: i32, %arg1: memref<5x256xf32, #tpu.memory_space<vmem>>, %arg2: memref<10x5xf32, #tpu.memory_space<vmem>>, %arg3: memref<5x10xf32, #tpu.memory_space<vmem>>, %arg4: memref<5x256xf32, #tpu.memory_space<vmem>>) attributes {dimension_semantics = [#tpu.dimension_semantics<parallel>], iteration_bounds = array<i64: 4>, scalar_prefetch = 0 : i64, scratch_operands = 0 : i64, tpu.core_type = #tpu.core_type<tc>, window_params = [{transform_indices = @transform_0, window_bounds = array<i64: 5, 256>}, {pipeline_mode = #tpu.pipeline_mode<synchronous>, transform_indices = @transform_1, window_bounds = array<i64: 10, 5>}, {pipeline_mode = #tpu.pipeline_mode<synchronous>, transform_indices = @transform_2, window_bounds = array<i64: 5, 10>}, {transform_indices = @transform_3, window_bounds = array<i64: 5, 256>}]} {
    %c0 = arith.constant 0 : index
    %c0_0 = arith.constant 0 : index
    %0 = vector.load %arg1[%c0, %c0_0] : memref<5x256xf32, #tpu.memory_space<vmem>>, vector<5x256xf32>
    %c0_1 = arith.constant 0 : index
    %c0_2 = arith.constant 0 : index
    %1 = vector.load %arg2[%c0_1, %c0_2] : memref<10x5xf32, #tpu.memory_space<vmem>>, vector<10x5xf32>
    %cst = arith.constant dense<0.000000e+00> : vector<10x256xf32>
    %2 = tpu.matmul %1, %0, %cst {dimension_numbers = #tpu.dot_dimension_numbers<[1], [0], [0], [1], [0, 0, 1, 1], [], []>} : vector<10x5xf32>, vector<5x256xf32>, vector<10x256xf32> -> vector<10x256xf32>
    %cst_3 = arith.constant 0.000000e+00 : f32
    %3 = vector.broadcast %cst_3 : f32 to vector<10x256xf32>
    %4 = arith.maximumf %2, %3 : vector<10x256xf32>
    %c0_4 = arith.constant 0 : index
    %c0_5 = arith.constant 0 : index
    %5 = vector.load %arg3[%c0_4, %c0_5] : memref<5x10xf32, #tpu.memory_space<vmem>>, vector<5x10xf32>
    %cst_6 = arith.constant dense<0.000000e+00> : vector<5x256xf32>
    %6 = tpu.matmul %5, %4, %cst_6 {dimension_numbers = #tpu.dot_dimension_numbers<[1], [0], [0], [1], [0, 0, 1, 1], [], []>} : vector<5x10xf32>, vector<10x256xf32>, vector<5x256xf32> -> vector<5x256xf32>
    %c0_7 = arith.constant 0 : index
    %c0_8 = arith.constant 0 : index
    %7 = vector.load %arg4[%c0_7, %c0_8] : memref<5x256xf32, #tpu.memory_space<vmem>>, vector<5x256xf32>
    tpu.vector_store %arg4[%c0_7, %c0_8], %6 {strides = array<i32>} : memref<5x256xf32, #tpu.memory_space<vmem>>, vector<5x256xf32>,
    return
  }
  func.func @transform_0(%arg0: i32) -> (i32, i32) {
    %c0_i32 = arith.constant 0 : i32
    %c0_i32_0 = arith.constant 0 : i32
    return %c0_i32, %arg0 : i32, i32
  }
  func.func @transform_1(%arg0: i32) -> (i32, i32) {
    %c0_i32 = arith.constant 0 : i32
    %c0_i32_0 = arith.constant 0 : i32
    %c0_i32_1 = arith.constant 0 : i32
    return %c0_i32, %c0_i32_0 : i32, i32
  }
  func.func @transform_2(%arg0: i32) -> (i32, i32) {
    %c0_i32 = arith.constant 0 : i32
    %c0_i32_0 = arith.constant 0 : i32
    %c0_i32_1 = arith.constant 0 : i32
    return %c0_i32, %c0_i32_0 : i32, i32
  }
  func.func @transform_3(%arg0: i32) -> (i32, i32) {
    %c0_i32 = arith.constant 0 : i32
    %c0_i32_0 = arith.constant 0 : i32
    return %c0_i32, %arg0 : i32, i32
  }
}

</mosaic_0001>

<llo_original>
// kernel: tpu_custom_call.1
$region0: #{tpu_custom_call.1}
  #allocation0 [shape = 'u32[]', space=smem, size = 0x4, offset = 0x4, fixed_abs, tag = 'smem constant byte address 0x4 - core index']
  #allocation1 [shape = 'u32[144,128]{1,0:T(1,128)}', space=vmem, size = 0x12000, scoped, tag = 'internal scratch']
  %s0 = inlined_call_operand.hbm [shape: f32[5,1024], index: 0, kind: input, shape index: {}]
  %s1 = inlined_call_operand.vmem [shape: f32[10,5], index: 1, kind: input, shape index: {}]
  %s2 = inlined_call_operand.vmem [shape: f32[5,10], index: 2, kind: input, shape index: {}]
  %s3 = inlined_call_operand.hbm [shape: f32[5,1024], index: 3, kind: output, shape index: {}]
  %s4 = sld [smem:[#allocation0]]
  $region49: #{tpu_custom_call.1} parent=0
    _
  %s6 = ssub.s32 1, %s4
  %s7 = scalar_select 0, %s6, %s4
  $region1: #{tpu_custom_call.1} parent=0
    #allocation2 [shape = 'u8[16384]{0}', space=vmem, size = 0x4000, scoped, tag = 'input window, operand 0']
    #allocation3 [shape = 's32[2]{0}', space=sflag, size = 0x8, scoped, tag = 'scoped memory for tpu_custom_call.1']
    #allocation4 [shape = 's32[2]{0}', space=sflag, size = 0x8, scoped, tag = 'scoped memory for tpu_custom_call.1']
    #allocation5 [shape = 'u8[16384]{0}', space=vmem, size = 0x4000, scoped, tag = 'output window, operand 0']
    %8 = vsyncpa [#allocation3], 0
    %s9 = scalar_lea.sflag [#allocation3], 1
    %10 = vsyncpa %s9, 0
    %11 = vsyncpa [#allocation4], 0
    %s12 = scalar_lea.sflag [#allocation4], 1
    %13 = vsyncpa %s12, 0
    loop: start=0, step=1, limit=6
    $region2: #{tpu_custom_call.1} parent=1 // loop_pre_header
      _
    $region3: #{tpu_custom_call.1} parent=1 // loop_header
      %s15 = sphi 0, %s19
      %p16 = scmp.ge.s32.totalorder %s15, 6
      %s25 = sphi 0, %s27
      %s28 = sphi 0, %s25
      %s29 = sphi 0, %s28
      %s45 = sphi 0, %s29
      %s49 = sphi 0, %s49
      %s51 = sphi 0, %s49
      %s52 = sphi 0, %s51
      %s66 = sphi 0, %s52
      %s70 = sphi 0, %s70
      %s72 = sphi 0, %s70
      %s73 = sphi 0, %s72
      %s87 = sphi 0, %s73
      %s93 = sphi 0, %s95
      %s96 = sphi 0, %s93
      %s97 = sphi 0, %s96
      %s113 = sphi 0, %s97
    $region4: #{tpu_custom_call.1} parent=1 // loop_header_branch
      %18 = sbr.rel (%p16) target = $region8
    $region5: #{tpu_custom_call.1} parent=1 // loop_body
      %s20 = ssub.s32 %s15, 1
      %s21 = ssub.s32 %s15, 2
      %s22 = sadd.s32 %s15, 1
      %s23 = ssub.s32 %s15, %s22
      %p24 = scmp.eq.s32.totalorder %s23, 0
      %s26 = sadd.s32 %s25, 1
      %s27 = scalar_select %p24, %s25, %s26
      %p30 = pneg %p24
      %p31 = scmp.eq.s32.totalorder %s15, 3
      %p32 = por %p30, %p31
      %p33 = scmp.ne.s32.totalorder %s25, %s28
      %p34 = scmp.eq.s32.totalorder %s15, 0
      %p35 = por %p33, %p34
      %p36 = scmp.ne.s32.totalorder %s25, %s28
      %p37 = scmp.eq.s32.totalorder %s20, 3
      %p38 = por %p36, %p37
      %p39 = scmp.ne.s32.totalorder %s28, %s29
      %p40 = scmp.eq.s32.totalorder %s20, 0
      %p41 = por %p39, %p40
      %p42 = scmp.ne.s32.totalorder %s28, %s29
      %p43 = scmp.eq.s32.totalorder %s21, 3
      %p44 = por %p42, %p43
      %p46 = scmp.ne.s32.totalorder %s29, %s45
      %p47 = scmp.eq.s32.totalorder %s21, 0
      %p48 = por %p46, %p47
      %s50 = sadd.s32 %s49, 1
      %p53 = scmp.eq.s32.totalorder %s15, 3
      %p54 = scmp.ne.s32.totalorder %s49, %s51
      %p55 = scmp.eq.s32.totalorder %s15, 0
      %p56 = por %p54, %p55
      %p57 = scmp.ne.s32.totalorder %s49, %s51
      %p58 = scmp.eq.s32.totalorder %s20, 3
      %p59 = por %p57, %p58
      %p60 = scmp.ne.s32.totalorder %s51, %s52
      %p61 = scmp.eq.s32.totalorder %s20, 0
      %p62 = por %p60, %p61
      %p63 = scmp.ne.s32.totalorder %s51, %s52
      %p64 = scmp.eq.s32.totalorder %s21, 3
      %p65 = por %p63, %p64
      %p67 = scmp.ne.s32.totalorder %s52, %s66
      %p68 = scmp.eq.s32.totalorder %s21, 0
      %p69 = por %p67, %p68
      %s71 = sadd.s32 %s70, 1
      %p74 = scmp.eq.s32.totalorder %s15, 3
      %p75 = scmp.ne.s32.totalorder %s70, %s72
      %p76 = scmp.eq.s32.totalorder %s15, 0
      %p77 = por %p75, %p76
      %p78 = scmp.ne.s32.totalorder %s70, %s72
      %p79 = scmp.eq.s32.totalorder %s20, 3
      %p80 = por %p78, %p79
      %p81 = scmp.ne.s32.totalorder %s72, %s73
      %p82 = scmp.eq.s32.totalorder %s20, 0
      %p83 = por %p81, %p82
      %p84 = scmp.ne.s32.totalorder %s72, %s73
      %p85 = scmp.eq.s32.totalorder %s21, 3
      %p86 = por %p84, %p85
      %p88 = scmp.ne.s32.totalorder %s73, %s87
      %p89 = scmp.eq.s32.totalorder %s21, 0
      %p90 = por %p88, %p89
      %s91 = ssub.s32 %s15, %s22
      %p92 = scmp.eq.s32.totalorder %s91, 0
      %s94 = sadd.s32 %s93, 1
      %s95 = scalar_select %p92, %s93, %s94
      %p98 = pneg %p92
      %p99 = scmp.eq.s32.totalorder %s15, 3
      %p100 = por %p98, %p99
      %p101 = scmp.ne.s32.totalorder %s93, %s96
      %p102 = scmp.eq.s32.totalorder %s15, 0
      %p103 = por %p101, %p102
      %p104 = scmp.ne.s32.totalorder %s93, %s96
      %p105 = scmp.eq.s32.totalorder %s20, 3
      %p106 = por %p104, %p105
      %p107 = scmp.ne.s32.totalorder %s96, %s97
      %p108 = scmp.eq.s32.totalorder %s20, 0
      %p109 = por %p107, %p108
      %p110 = scmp.ne.s32.totalorder %s96, %s97
      %p111 = scmp.eq.s32.totalorder %s21, 3
      %p112 = por %p110, %p111
      %p114 = scmp.ne.s32.totalorder %s97, %s113
      %p115 = scmp.eq.s32.totalorder %s21, 0
      %p116 = por %p114, %p115
      %p117 = scmp.le.s32.totalorder 1, %s15
      %p118 = scmp.lt.s32.totalorder %s15, 5
      %p119 = pnand %p117, %p118
      %p120 = pneg %p119
      // Predicated region
      $region9: #{tpu_custom_call.1} parent=5 // pred_check
        _
      $region10: #{tpu_custom_call.1} parent=5 // pred_check_branch
        %122 = sbr.rel (%p119) target = $region12
      $region11: #{tpu_custom_call.1} parent=5 // pred_region
        %s123 = ssub.s32 %s15, 1
        // Predicated region
        $region13: #{tpu_custom_call.1} parent=11 // pred_check
          %p124 = pneg %p62
        $region14: #{tpu_custom_call.1} parent=11 // pred_check_branch
          %126 = sbr.rel (%p124) target = $region16
        $region15: #{tpu_custom_call.1} parent=11 // pred_region
          _
        $region16: #{tpu_custom_call.1} parent=11 // pred_fallthru
          _
        // Predicated region
        $region17: #{tpu_custom_call.1} parent=11 // pred_check
          %p127 = pneg %p83
        $region18: #{tpu_custom_call.1} parent=11 // pred_check_branch
          %129 = sbr.rel (%p127) target = $region20
        $region19: #{tpu_custom_call.1} parent=11 // pred_region
          _
        $region20: #{tpu_custom_call.1} parent=11 // pred_fallthru
          _
      $region12: #{tpu_custom_call.1} parent=5 // pred_fallthru
        _
      %p130 = scmp.lt.s32.totalorder %s15, 4
      // Predicated region
      $region21: #{tpu_custom_call.1} parent=5 // pred_check
        %p131 = pneg %p130
      $region22: #{tpu_custom_call.1} parent=5 // pred_check_branch
        %133 = sbr.rel (%p131) target = $region24
      $region23: #{tpu_custom_call.1} parent=5 // pred_region
        // Predicated region
        $region25: #{tpu_custom_call.1} parent=23 // pred_check
          %p134 = pneg %p35
        $region26: #{tpu_custom_call.1} parent=23 // pred_check_branch
          %136 = sbr.rel (%p134) target = $region28
        $region27: #{tpu_custom_call.1} parent=23 // pred_region
          %s137 = sand.u32 %s25, 1
          %s138 = scalar_lea.sflag [#allocation3], %s137
          %s139 = sand.u32 %s25, 1
          %s140 = smul.addr %s139, 16
          %s141 = scalar_lea.vmem [#allocation2], %s140
          %s142 = smul.u32 2, %s15
          %s144 = ssub.s32 256, 256
          %145 = vsyncadd %s138, %s144
          %s146 = smul.addr %s142, 128
          %s147 = scalar_lea.hbm %s0, %s146
          %s149 = sshll.u32 %s141, 4
          %s150 = int_to_ptr.vmem [resolvable:$true] %s149
          %152 = dma.hbm_to_vmem [thread:$0]  %s147, 256, %s150, %s138
        $region28: #{tpu_custom_call.1} parent=23 // pred_fallthru
          _
      $region24: #{tpu_custom_call.1} parent=5 // pred_fallthru
        _
      %p153 = scmp.le.s32.totalorder 1, %s15
      %p154 = scmp.lt.s32.totalorder %s15, 5
      %p155 = pnand %p153, %p154
      %p156 = pneg %p155
      // Predicated region
      $region29: #{tpu_custom_call.1} parent=5 // pred_check
        _
      $region30: #{tpu_custom_call.1} parent=5 // pred_check_branch
        %158 = sbr.rel (%p155) target = $region32
      $region31: #{tpu_custom_call.1} parent=5 // pred_region
        %s159 = ssub.s32 %s15, 1
        %s160 = sand.u32 %s28, 1
        %s161 = scalar_lea.sflag [#allocation3], %s160
        %s162 = sand.u32 %s28, 1
        %s163 = smul.addr %s162, 16
        %s164 = scalar_lea.vmem [#allocation2], %s163
        // Predicated region
        $region33: #{tpu_custom_call.1} parent=31 // pred_check
          %p165 = pneg %p41
        $region34: #{tpu_custom_call.1} parent=31 // pred_check_branch
          %167 = sbr.rel (%p165) target = $region36
        $region35: #{tpu_custom_call.1} parent=31 // pred_region
          %168 = dma.done %s161, 256
        $region36: #{tpu_custom_call.1} parent=31 // pred_fallthru
          _
        %s169 = sand.u32 %s28, 1
        %s170 = scalar_lea.sflag [#allocation3], %s169
        %s171 = sand.u32 %s28, 1
        %s172 = smul.addr %s171, 16
        %s173 = scalar_lea.vmem [#allocation2], %s172
        %p174 = pneg %p41
        %p175 = pneg %p38
        %p176 = pneg %p62
        %p177 = pneg %p59
        %p178 = pneg %p83
        %p179 = pneg %p80
        %p180 = pneg %p109
        %p181 = pneg %p106
        %s182 = sand.u32 %s96, 1
        %s183 = scalar_lea.sflag [#allocation4], %s182
        %s184 = sand.u32 %s96, 1
        %s185 = smul.addr %s184, 16
        %s186 = scalar_lea.vmem [#allocation5], %s185
        %s187 = smul.u32 2, %s20
        %s188 = smul.u32 2, %s20
        %v189 = vld [vmem:[%s164] sm:$0x1f]
        %v190 = vld [vmem:[%s164 + $0x8] sm:$0x1f]
        %v191 = vld [vmem:[%s1] sm:$0xff]
        %v192 = vld [vmem:[%s1 + $0x8] sm:$0x3]
        %vm193 = vcmask 39936
        %v195 = vsel %vm193, %v191, 0
        %v198 = vsel %vm193, %v192, 0
        %vm200 = vcmask 1044480
        %v202 = vsel %vm200, %v189, 0
        %v205 = vsel %vm200, %v190, 0
        %207 = vmatprep.subr.mxu0 %v205
        %208 = vmatpush1.msra.mxu0 %v202
        %209 = vmatprep.subr.mxu0 0.0
        %210 = vmatpush1.msra.mxu0 0.0
        %211 = vmatprep.subr.mxu0 0.0
        %212 = vmatpush1.msra.mxu0 0.0
        %213 = vmatprep.subr.mxu0 0.0
        %214 = vmatpush1.msra.mxu0 0.0
        %215 = vmatprep.subr.mxu0 0.0
        %216 = vmatpush1.msra.mxu0 0.0
        %217 = vmatprep.subr.mxu0 0.0
        %218 = vmatpush1.msra.mxu0 0.0
        %219 = vmatprep.subr.mxu0 0.0
        %220 = vmatpush1.msra.mxu0 0.0
        %221 = vmatprep.subr.mxu0 0.0
        %222 = vmatpush1.msra.mxu0 0.0
        %223 = vmatprep.subr.mxu0 0.0
        %224 = vmatpush1.msra.mxu0 0.0
        %225 = vmatprep.subr.mxu0 0.0
        %226 = vmatpush1.msra.mxu0 0.0
        %227 = vmatprep.subr.mxu0 0.0
        %228 = vmatpush1.msra.mxu0 0.0
        %229 = vmatprep.subr.mxu0 0.0
        %230 = vmatpush1.msra.mxu0 0.0
        %231 = vmatprep.subr.mxu0 0.0
        %232 = vmatpush1.msra.mxu0 0.0
        %233 = vmatprep.subr.mxu0 0.0
        %234 = vmatpush1.msra.mxu0 0.0
        %235 = vmatprep.subr.mxu0 0.0
        %236 = vmatpush1.msra.mxu0 0.0
        %237 = vmatprep.subr.mxu0 0.0
        %238 = vmatpush1.msra.mxu0 0.0
        %239 = vmatprep.subr.mxu0 0.0
        %240 = vmatpush1.msra.mxu0 0.0
        %241 = vmatprep.subr.mxu0 0.0
        %242 = vmatpush1.msra.mxu0 0.0
        %243 = vmatprep.subr.mxu0 0.0
        %244 = vmatpush1.msra.mxu0 0.0
        %245 = vmatprep.subr.mxu0 0.0
        %246 = vmatpush1.msra.mxu0 0.0
        %247 = vmatprep.subr.mxu0 0.0
        %248 = vmatpush1.msra.mxu0 0.0
        %249 = vmatprep.subr.mxu0 0.0
        %250 = vmatpush1.msra.mxu0 0.0
        %251 = vmatprep.subr.mxu0 0.0
        %252 = vmatpush1.msra.mxu0 0.0
        %253 = vmatprep.subr.mxu0 0.0
        %254 = vmatpush1.msra.mxu0 0.0
        %255 = vmatprep.subr.mxu0 0.0
        %256 = vmatpush1.msra.mxu0 0.0
        %257 = vmatprep.subr.mxu0 0.0
        %258 = vmatpush1.msra.mxu0 0.0
        %259 = vmatprep.subr.mxu0 0.0
        %260 = vmatpush1.msra.mxu0 0.0
        %261 = vmatprep.subr.mxu0 0.0
        %262 = vmatpush1.msra.mxu0 0.0
        %263 = vmatprep.subr.mxu0 0.0
        %264 = vmatpush1.msra.mxu0 0.0
        %265 = vmatprep.subr.mxu0 0.0
        %266 = vmatpush1.msra.mxu0 0.0
        %267 = vmatprep.subr.mxu0 0.0
        %268 = vmatpush1.msra.mxu0 0.0
        %269 = vmatprep.subr.mxu0 0.0
        %270 = vmatpush1.msra.mxu0 0.0
        %271 = vmatprep.mubr.f32.mxu0 0.0
        %272 = vmatmul.mubr.f32.gmra.mrb[0].mxu0 %v195
        %v273 = vpop.f32.mrb[0].mxu0
        %v274 = vadd.f32 0.0, %v273
        %v275 = vpop.f32.mrb[0].mxu0
        %v276 = vadd.f32 0.0, %v275
        %277 = vmatprep.mubr.f32.mxu0 0.0
        %278 = vmatmul.mubr.f32.gmra.mrb[0].mxu0 %v198
        %v279 = vpop.f32.mrb[0].mxu0
        %v280 = vadd.f32 0.0, %v279
        %v281 = vpop.f32.mrb[0].mxu0
        %v282 = vadd.f32 0.0, %v281
        %283 = vdwg.mxu0
        %v284 = vmax.f32 %v274, 0.0
        %v285 = vmax.f32 %v276, 0.0
        %v286 = vmax.f32 %v280, 0.0
        %v287 = vmax.f32 %v282, 0.0
        %v288 = vld [vmem:[%s2] sm:$0x1f]
        %vm289 = vcmask 80896
        %v291 = vsel %vm289, %v288, 0
        %vm293 = vcmask 1041408
        %v295 = vsel %vm293, %v286, 0
        %v298 = vsel %vm293, %v287, 0
        %300 = vmatprep.subr.mxu0 %v285
        %301 = vmatpush1.msra.mxu0 %v284
        %302 = vmatprep.subr.mxu0 %v298
        %303 = vmatpush1.msra.mxu0 %v295
        %304 = vmatprep.subr.mxu0 0.0
        %305 = vmatpush1.msra.mxu0 0.0
        %306 = vmatprep.subr.mxu0 0.0
        %307 = vmatpush1.msra.mxu0 0.0
        %308 = vmatprep.subr.mxu0 0.0
        %309 = vmatpush1.msra.mxu0 0.0
        %310 = vmatprep.subr.mxu0 0.0
        %311 = vmatpush1.msra.mxu0 0.0
        %312 = vmatprep.subr.mxu0 0.0
        %313 = vmatpush1.msra.mxu0 0.0
        %314 = vmatprep.subr.mxu0 0.0
        %315 = vmatpush1.msra.mxu0 0.0
        %316 = vmatprep.subr.mxu0 0.0
        %317 = vmatpush1.msra.mxu0 0.0
        %318 = vmatprep.subr.mxu0 0.0
        %319 = vmatpush1.msra.mxu0 0.0
        %320 = vmatprep.subr.mxu0 0.0
        %321 = vmatpush1.msra.mxu0 0.0
        %322 = vmatprep.subr.mxu0 0.0
        %323 = vmatpush1.msra.mxu0 0.0
        %324 = vmatprep.subr.mxu0 0.0
        %325 = vmatpush1.msra.mxu0 0.0
        %326 = vmatprep.subr.mxu0 0.0
        %327 = vmatpush1.msra.mxu0 0.0
        %328 = vmatprep.subr.mxu0 0.0
        %329 = vmatpush1.msra.mxu0 0.0
        %330 = vmatprep.subr.mxu0 0.0
        %331 = vmatpush1.msra.mxu0 0.0
        %332 = vmatprep.subr.mxu0 0.0
        %333 = vmatpush1.msra.mxu0 0.0
        %334 = vmatprep.subr.mxu0 0.0
        %335 = vmatpush1.msra.mxu0 0.0
        %336 = vmatprep.subr.mxu0 0.0
        %337 = vmatpush1.msra.mxu0 0.0
        %338 = vmatprep.subr.mxu0 0.0
        %339 = vmatpush1.msra.mxu0 0.0
        %340 = vmatprep.subr.mxu0 0.0
        %341 = vmatpush1.msra.mxu0 0.0
        %342 = vmatprep.subr.mxu0 0.0
        %343 = vmatpush1.msra.mxu0 0.0
        %344 = vmatprep.subr.mxu0 0.0
        %345 = vmatpush1.msra.mxu0 0.0
        %346 = vmatprep.subr.mxu0 0.0
        %347 = vmatpush1.msra.mxu0 0.0
        %348 = vmatprep.subr.mxu0 0.0
        %349 = vmatpush1.msra.mxu0 0.0
        %350 = vmatprep.subr.mxu0 0.0
        %351 = vmatpush1.msra.mxu0 0.0
        %352 = vmatprep.subr.mxu0 0.0
        %353 = vmatpush1.msra.mxu0 0.0
        %354 = vmatprep.subr.mxu0 0.0
        %355 = vmatpush1.msra.mxu0 0.0
        %356 = vmatprep.subr.mxu0 0.0
        %357 = vmatpush1.msra.mxu0 0.0
        %358 = vmatprep.subr.mxu0 0.0
        %359 = vmatpush1.msra.mxu0 0.0
        %360 = vmatprep.subr.mxu0 0.0
        %361 = vmatpush1.msra.mxu0 0.0
        %362 = vmatprep.subr.mxu0 0.0
        %363 = vmatpush1.msra.mxu0 0.0
        %364 = vmatprep.mubr.f32.mxu0 0.0
        %365 = vmatmul.mubr.f32.gmra.mrb[0].mxu0 %v291
        %v366 = vpop.f32.mrb[0].mxu0
        %v367 = vadd.f32 0.0, %v366
        %v368 = vpop.f32.mrb[0].mxu0
        %v369 = vadd.f32 0.0, %v368
        %370 = vdwg.mxu0
        %371 = vst [vmem:[%s186] sm:$0x1f] %v367
        %372 = vst [vmem:[%s186 + $0x8] sm:$0x1f] %v369
        %s373 = sand.u32 %s96, 1
        %s374 = scalar_lea.sflag [#allocation4], %s373
        %s375 = sand.u32 %s96, 1
        %s376 = smul.addr %s375, 16
        %s377 = scalar_lea.vmem [#allocation5], %s376
        // Predicated region
        $region37: #{tpu_custom_call.1} parent=31 // pred_check
          %p378 = pneg %p106
        $region38: #{tpu_custom_call.1} parent=31 // pred_check_branch
          %380 = sbr.rel (%p378) target = $region40
        $region39: #{tpu_custom_call.1} parent=31 // pred_region
          %s381 = smul.u32 2, %s20
          %s383 = ssub.s32 256, 256
          %384 = vsyncadd %s374, %s383
          %s385 = smul.addr %s381, 128
          %s386 = scalar_lea.hbm %s3, %s385
          %s388 = sshll.u32 %s377, 4
          %s389 = int_to_ptr.vmem [resolvable:$true] %s388
          %391 = dma.vmem_to_hbm [thread:$0]  %s389, 256, %s386, %s374
        $region40: #{tpu_custom_call.1} parent=31 // pred_fallthru
          _
      $region32: #{tpu_custom_call.1} parent=5 // pred_fallthru
        _
      %p392 = scmp.le.s32.totalorder 2, %s15
      // Predicated region
      $region41: #{tpu_custom_call.1} parent=5 // pred_check
        %p393 = pneg %p392
      $region42: #{tpu_custom_call.1} parent=5 // pred_check_branch
        %395 = sbr.rel (%p393) target = $region44
      $region43: #{tpu_custom_call.1} parent=5 // pred_region
        %s396 = ssub.s32 %s15, 2
        // Predicated region
        $region45: #{tpu_custom_call.1} parent=43 // pred_check
          %p397 = pneg %p112
        $region46: #{tpu_custom_call.1} parent=43 // pred_check_branch
          %399 = sbr.rel (%p397) target = $region48
        $region47: #{tpu_custom_call.1} parent=43 // pred_region
          %s400 = sand.u32 %s97, 1
          %s401 = scalar_lea.sflag [#allocation4], %s400
          %s402 = sand.u32 %s97, 1
          %s403 = smul.addr %s402, 16
          %s404 = scalar_lea.vmem [#allocation5], %s403
          %405 = dma.done %s401, 256
        $region48: #{tpu_custom_call.1} parent=43 // pred_fallthru
          _
      $region44: #{tpu_custom_call.1} parent=5 // pred_fallthru
        _
    $region6: #{tpu_custom_call.1} parent=1 // loop_footer
      %s19 = sadd.s32 1, %s15
    $region7: #{tpu_custom_call.1} parent=1 // loop_footer_branch
      %14 = sbr.rel target = $region3
    $region8: #{tpu_custom_call.1} parent=1 // loop_exit
      _
    %406 = vsyncpa [#allocation3], 1
    %s407 = scalar_lea.sflag [#allocation3], 1
    %408 = vsyncpa %s407, 1
    %409 = vsyncpa [#allocation4], 1
    %s410 = scalar_lea.sflag [#allocation4], 1
    %411 = vsyncpa %s410, 1

</llo_original>
